<compile_context>
chip_gen: v5e
topology: v5e:2x2
jax: 0.10.0
libtpu: 0.0.40
codegen_flags: <defaults>
</compile_context>

<pallas_src>
import functools

import jax
import jax.numpy as jnp
from jax.experimental import pallas as pl
from jax.experimental.pallas import tpu as pltpu


def _round_up(x: int, m: int) -> int:
    return ((x + m - 1) // m) * m


def _cdiv(a: int, b: int) -> int:
    return (a + b - 1) // b


# -----------------------------------------------------------------------------
# Kernel bodies (transposed layout: params on sublanes, atoms on lanes)
# -----------------------------------------------------------------------------

def _gather_select_kernel(types_ref, table_t_ref, out_t_ref, *, num_types):
    """Small-T path: unrolled T-way select on the VPU (no one-hot, no MXU).

    types_ref   : (1, TILE_N)      int32  -- atom type ids (lane-dense)
    table_t_ref : (P_pad8, T_pad)  float  -- transposed padded table (resident)
    out_t_ref   : (P_pad8, TILE_N) float  -- transposed gathered parameters
    """
    types = types_ref[...]                                    # (1, TILE_N)
    acc = jnp.zeros(out_t_ref.shape, jnp.float32)
    # num_types is small (<= 16): a static unrolled select chain is cheaper
    # than materializing a (T_pad, TILE_N) one-hot and a decomposed f32 MXU
    # pass, and keeps vreg / VMEM pressure low so the atom tile can grow.
    for t in range(num_types):
        col = table_t_ref[:, t:t + 1]                         # (P_pad8, 1) static slice
        acc = jnp.where(types == t, col, acc)                 # broadcast both ways
    out_t_ref[...] = acc.astype(out_t_ref.dtype)


def _gather_dot_kernel(types_ref, table_t_ref, out_t_ref):
    """General path: one-hot contraction on the MXU.

    out_T[p, n] = sum_t table_T[p, t] * (types[n] == t)
    Out-of-range / negative ids match no row -> all-zero column (PyTorch
    indexing would raise instead; documented divergence).
    """
    types = types_ref[...]                                    # (1, TILE_N)
    t_pad = table_t_ref.shape[1]
    tile_n = types.shape[1]
    t_iota = jax.lax.broadcasted_iota(jnp.int32, (t_pad, tile_n), 0)
    onehot_t = (t_iota == types).astype(table_t_ref.dtype)    # (T_pad, TILE_N)
    out_t_ref[...] = jnp.dot(
        table_t_ref[...], onehot_t, preferred_element_type=jnp.float32
    ).astype(out_t_ref.dtype)


# -----------------------------------------------------------------------------
# Wrappers
# -----------------------------------------------------------------------------

def prepare_type_parameter_table(type_parameters):
    """Pad + transpose the (T, P) table to (P_pad8, T_pad128).  Done once at
    module init so the per-call path carries no pad op or extra table copy."""
    num_types, num_params = type_parameters.shape
    p_pad = _round_up(max(num_params, 1), 8)     # sublane-aligned (f32)
    t_pad = _round_up(max(num_types, 1), 128)    # lane-aligned contraction dim
    return jnp.pad(type_parameters.T,
                   ((0, p_pad - num_params), (0, t_pad - num_types)))


def gather_type_parameters_pallas(table_t, molecule_atom_types, *, num_types,
                                  num_params, max_tile_n=8192,
                                  select_path_max_types=16):
    """Pallas `type_parameters[molecule_atom_types]` with a pre-padded table.

    table_t             : (P_pad8, T_pad128) float  (prepare_type_parameter_table)
    molecule_atom_types : (N,) int
    returns             : (N, num_params) float
    """
    num_atoms = molecule_atom_types.shape[0]
    p_pad, t_pad = table_t.shape

    # Atom tile along lanes; a single (ragged, write-masked) block for small N.
    tile_n = min(max_tile_n, _round_up(max(num_atoms, 1), 128))
    grid_n = _cdiv(num_atoms, tile_n)
    if grid_n > 1 and grid_n % 2 == 1:
        # v7x shards the "parallel" axis over 2 TensorCores; keep it balanced.
        tile_n = _round_up(_cdiv(num_atoms, grid_n + 1), 128)
        grid_n = _cdiv(num_atoms, tile_n)

    if num_types <= select_path_max_types:
        kernel = functools.partial(_gather_select_kernel, num_types=num_types)
    else:
        kernel = _gather_dot_kernel

    types_row = molecule_atom_types.astype(jnp.int32).reshape(1, num_atoms)

    # TODO(synk): for very large tables (approaching v7x's ~32 MiB scoped
    # VMEM) single-buffer the resident table (pipeline_mode=pl.Buffered(1))
    # or add a T-axis grid dimension.
    out_t = pl.pallas_call(
        kernel,
        out_shape=jax.ShapeDtypeStruct((p_pad, num_atoms), table_t.dtype),
        grid=(grid_n,),
        in_specs=[
            pl.BlockSpec((1, tile_n), lambda i: (0, i)),       # type ids (lane-dense)
            pl.BlockSpec((p_pad, t_pad), lambda i: (0, 0)),    # resident table
        ],
        out_specs=pl.BlockSpec((p_pad, tile_n), lambda i: (0, i)),
        compiler_params=pltpu.CompilerParams(
            dimension_semantics=("parallel",)),
    )(types_row, table_t)

    # Layout plumbing back to the module's (N, P) convention (cheap: 8*N*4 B).
    return out_t[:num_params, :].T


class AtomCenteredStaticSites:
    """JAX/Pallas port of the PyTorch module's forward pass."""

    def __init__(self, initial_type_parameters, *, min_pallas_atoms=512):
        self.type_parameters = jnp.asarray(initial_type_parameters, jnp.float32)
        self.num_types, self.num_params = self.type_parameters.shape
        self.min_pallas_atoms = min_pallas_atoms
        # Pre-padded, transposed table, computed once.  Re-derive if the
        # parameter is updated in place during training.
        self.table_t = prepare_type_parameter_table(self.type_parameters)

    def gather_site_parameters(self, molecule_atom_types):
        num_atoms = molecule_atom_types.shape[0]
        if num_atoms < self.min_pallas_atoms:
            # Tiny gather: pallas_call fixed overhead dominates the ~hundreds
            # of result bytes; a plain XLA gather is faster on every chip.
            return self.type_parameters[molecule_atom_types]
        return gather_type_parameters_pallas(
            self.table_t, molecule_atom_types,
            num_types=self.num_types, num_params=self.num_params)

    def __call__(self, positions, edge_index, batch_vec, interaction_types,
                 molecule_types, molecule_atom_types):
        del molecule_types
        sites_positions = positions
        sites_parameters = self.gather_site_parameters(molecule_atom_types)
        # TODO(synk): boolean-mask column selection has a data-dependent
        # output shape (no static-shape Pallas equivalent); done eagerly in
        # plain JAX, exactly matching edge_index[:, interaction_types == 1].
        sites_edge_index = edge_index[:, interaction_types == 1]
        if batch_vec is not None:
            sites_batch = batch_vec
        else:
            # PyTorch uses int64; int32 here (JAX default without x64).
            sites_batch = jnp.zeros((positions.shape[0],), dtype=jnp.int32)
        return sites_positions, sites_parameters, sites_edge_index, sites_batch


if __name__ == "__main__":
    key = jax.random.PRNGKey(0)
    k_pos, k_par, k_typ, k_edg, k_int, k_bigp, k_bigt = jax.random.split(key, 7)

    num_atoms = 22           # deliberately NOT a multiple of 8 / 128
    num_types = 8            # unique molecule atom types (select-path kernel)
    num_params = 4           # parameters per site
    num_edges = 32

    positions = jax.random.normal(k_pos, (num_atoms, 3), dtype=jnp.float32)
    type_parameters = jax.random.normal(
        k_par, (num_types, num_params), dtype=jnp.float32)
    molecule_atom_types = jax.random.randint(
        k_typ, (num_atoms,), 0, num_types, dtype=jnp.int32)
    edge_index = jax.random.randint(
        k_edg, (2, num_edges), 0, num_atoms, dtype=jnp.int32)
    interaction_types = jax.random.randint(
        k_int, (num_edges,), 0, 2, dtype=jnp.int32)
    molecule_types = jnp.zeros((num_atoms,), dtype=jnp.int32)
    batch_vec = None  # exercise the "batch.batch is None" path

    module = AtomCenteredStaticSites(type_parameters)
    outs = module(positions, edge_index, batch_vec, interaction_types,
                  molecule_types, molecule_atom_types)
    sites_positions, sites_parameters, sites_edge_index, sites_batch = outs
    for o in outs:
        jax.block_until_ready(o)

    ref_params = type_parameters[molecule_atom_types]
    assert sites_parameters.shape == (num_atoms, num_params)
    assert jnp.allclose(sites_parameters, ref_params, atol=1e-6)
    assert jnp.array_equal(sites_positions, positions)
    assert jnp.array_equal(sites_edge_index,
                           edge_index[:, interaction_types == 1])
    assert jnp.array_equal(sites_batch,
                           jnp.zeros((num_atoms,), dtype=jnp.int32))

    # Pallas select-path kernel (T <= 16), small N -> single write-masked block.
    small_pallas = gather_type_parameters_pallas(
        module.table_t, molecule_atom_types,
        num_types=num_types, num_params=num_params)
    jax.block_until_ready(small_pallas)
    assert small_pallas.shape == (num_atoms, num_params)
    assert jnp.allclose(small_pallas, ref_params, atol=1e-6)

    # Pallas one-hot/MXU kernel (larger T), multi-tile grid rebalanced to an
    # even number of steps (v7x 2-TC balance) with a ragged final block.
    big_types_count = 40     # > select_path_max_types -> dot path
    big_n = 1300             # not a tile multiple -> ragged block + rebalance
    big_table = jax.random.normal(
        k_bigp, (big_types_count, num_params), dtype=jnp.float32)
    big_atom_types = jax.random.randint(
        k_bigt, (big_n,), 0, big_types_count, dtype=jnp.int32)
    big_table_t = prepare_type_parameter_table(big_table)
    big_out = gather_type_parameters_pallas(
        big_table_t, big_atom_types,
        num_types=big_types_count, num_params=num_params,
        max_tile_n=512)      # grid 3 -> rebalanced to 4 tiles of 384 lanes
    jax.block_until_ready(big_out)
    assert big_out.shape == (big_n, num_params)
    assert jnp.allclose(big_out, big_table[big_atom_types], atol=1e-6)

    print("KERNEL_OK")
</pallas_src>

<mosaic_0001>
module attributes {stable_mosaic.version = 11 : i64} {
  func.func @_gather_select_kernel(%arg0: i32, %arg1: memref<1x128xi32, #tpu.memory_space<vmem>>, %arg2: memref<8x128xf32, #tpu.memory_space<vmem>>, %arg3: memref<8x128xf32, #tpu.memory_space<vmem>>) attributes {dimension_semantics = [#tpu.dimension_semantics<parallel>], iteration_bounds = array<i64: 1>, scalar_prefetch = 0 : i64, scratch_operands = 0 : i64, tpu.core_type = #tpu.core_type<tc>, window_params = [{transform_indices = @transform_0, window_bounds = array<i64: 1, 128>}, {pipeline_mode = #tpu.pipeline_mode<synchronous>, transform_indices = @transform_1, window_bounds = array<i64: 8, 128>}, {transform_indices = @transform_2, window_bounds = array<i64: 8, 128>}]} {
    %c0 = arith.constant 0 : index
    %c0_0 = arith.constant 0 : index
    %0 = vector.load %arg1[%c0, %c0_0] : memref<1x128xi32, #tpu.memory_space<vmem>>, vector<1x128xi32>
    %cst = arith.constant 0.000000e+00 : f32
    %1 = vector.broadcast %cst : f32 to vector<8x128xf32>
    %c0_1 = arith.constant 0 : index
    %c0_2 = arith.constant 0 : index
    %2 = vector.load %arg2[%c0_1, %c0_2] : memref<8x128xf32, #tpu.memory_space<vmem>>, vector<8x1xf32>
    %c0_i32 = arith.constant 0 : i32
    %3 = vector.broadcast %c0_i32 : i32 to vector<1x128xi32>
    %4 = arith.cmpi eq, %0, %3 : vector<1x128xi32>
    %5 = vector.shape_cast %4 : vector<1x128xi1> to vector<1x128xi1>
    %6 = vector.broadcast %5 : vector<1x128xi1> to vector<8x128xi1>
    %7 = vector.shape_cast %2 : vector<8x1xf32> to vector<8x1xf32>
    %8 = vector.broadcast %7 : vector<8x1xf32> to vector<8x128xf32>
    %9 = arith.select %6, %8, %1 : vector<8x128xi1>, vector<8x128xf32>
    %c0_3 = arith.constant 0 : index
    %c1 = arith.constant 1 : index
    %10 = vector.load %arg2[%c0_3, %c1] : memref<8x128xf32, #tpu.memory_space<vmem>>, vector<8x1xf32>
    %c1_i32 = arith.constant 1 : i32
    %11 = vector.broadcast %c1_i32 : i32 to vector<1x128xi32>
    %12 = arith.cmpi eq, %0, %11 : vector<1x128xi32>
    %13 = vector.shape_cast %12 : vector<1x128xi1> to vector<1x128xi1>
    %14 = vector.broadcast %13 : vector<1x128xi1> to vector<8x128xi1>
    %15 = vector.shape_cast %10 : vector<8x1xf32> to vector<8x1xf32>
    %16 = vector.broadcast %15 : vector<8x1xf32> to vector<8x128xf32>
    %17 = arith.select %14, %16, %9 : vector<8x128xi1>, vector<8x128xf32>
    %c0_4 = arith.constant 0 : index
    %c2 = arith.constant 2 : index
    %18 = vector.load %arg2[%c0_4, %c2] : memref<8x128xf32, #tpu.memory_space<vmem>>, vector<8x1xf32>
    %c2_i32 = arith.constant 2 : i32
    %19 = vector.broadcast %c2_i32 : i32 to vector<1x128xi32>
    %20 = arith.cmpi eq, %0, %19 : vector<1x128xi32>
    %21 = vector.shape_cast %20 : vector<1x128xi1> to vector<1x128xi1>
    %22 = vector.broadcast %21 : vector<1x128xi1> to vector<8x128xi1>
    %23 = vector.shape_cast %18 : vector<8x1xf32> to vector<8x1xf32>
    %24 = vector.broadcast %23 : vector<8x1xf32> to vector<8x128xf32>
    %25 = arith.select %22, %24, %17 : vector<8x128xi1>, vector<8x128xf32>
    %c0_5 = arith.constant 0 : index
    %c3 = arith.constant 3 : index
    %26 = vector.load %arg2[%c0_5, %c3] : memref<8x128xf32, #tpu.memory_space<vmem>>, vector<8x1xf32>
    %c3_i32 = arith.constant 3 : i32
    %27 = vector.broadcast %c3_i32 : i32 to vector<1x128xi32>
    %28 = arith.cmpi eq, %0, %27 : vector<1x128xi32>
    %29 = vector.shape_cast %28 : vector<1x128xi1> to vector<1x128xi1>
    %30 = vector.broadcast %29 : vector<1x128xi1> to vector<8x128xi1>
    %31 = vector.shape_cast %26 : vector<8x1xf32> to vector<8x1xf32>
    %32 = vector.broadcast %31 : vector<8x1xf32> to vector<8x128xf32>
    %33 = arith.select %30, %32, %25 : vector<8x128xi1>, vector<8x128xf32>
    %c0_6 = arith.constant 0 : index
    %c4 = arith.constant 4 : index
    %34 = vector.load %arg2[%c0_6, %c4] : memref<8x128xf32, #tpu.memory_space<vmem>>, vector<8x1xf32>
    %c4_i32 = arith.constant 4 : i32
    %35 = vector.broadcast %c4_i32 : i32 to vector<1x128xi32>
    %36 = arith.cmpi eq, %0, %35 : vector<1x128xi32>
    %37 = vector.shape_cast %36 : vector<1x128xi1> to vector<1x128xi1>
    %38 = vector.broadcast %37 : vector<1x128xi1> to vector<8x128xi1>
    %39 = vector.shape_cast %34 : vector<8x1xf32> to vector<8x1xf32>
    %40 = vector.broadcast %39 : vector<8x1xf32> to vector<8x128xf32>
    %41 = arith.select %38, %40, %33 : vector<8x128xi1>, vector<8x128xf32>
    %c0_7 = arith.constant 0 : index
    %c5 = arith.constant 5 : index
    %42 = vector.load %arg2[%c0_7, %c5] : memref<8x128xf32, #tpu.memory_space<vmem>>, vector<8x1xf32>
    %c5_i32 = arith.constant 5 : i32
    %43 = vector.broadcast %c5_i32 : i32 to vector<1x128xi32>
    %44 = arith.cmpi eq, %0, %43 : vector<1x128xi32>
    %45 = vector.shape_cast %44 : vector<1x128xi1> to vector<1x128xi1>
    %46 = vector.broadcast %45 : vector<1x128xi1> to vector<8x128xi1>
    %47 = vector.shape_cast %42 : vector<8x1xf32> to vector<8x1xf32>
    %48 = vector.broadcast %47 : vector<8x1xf32> to vector<8x128xf32>
    %49 = arith.select %46, %48, %41 : vector<8x128xi1>, vector<8x128xf32>
    %c0_8 = arith.constant 0 : index
    %c6 = arith.constant 6 : index
    %50 = vector.load %arg2[%c0_8, %c6] : memref<8x128xf32, #tpu.memory_space<vmem>>, vector<8x1xf32>
    %c6_i32 = arith.constant 6 : i32
    %51 = vector.broadcast %c6_i32 : i32 to vector<1x128xi32>
    %52 = arith.cmpi eq, %0, %51 : vector<1x128xi32>
    %53 = vector.shape_cast %52 : vector<1x128xi1> to vector<1x128xi1>
    %54 = vector.broadcast %53 : vector<1x128xi1> to vector<8x128xi1>
    %55 = vector.shape_cast %50 : vector<8x1xf32> to vector<8x1xf32>
    %56 = vector.broadcast %55 : vector<8x1xf32> to vector<8x128xf32>
    %57 = arith.select %54, %56, %49 : vector<8x128xi1>, vector<8x128xf32>
    %c0_9 = arith.constant 0 : index
    %c7 = arith.constant 7 : index
    %58 = vector.load %arg2[%c0_9, %c7] : memref<8x128xf32, #tpu.memory_space<vmem>>, vector<8x1xf32>
    %c7_i32 = arith.constant 7 : i32
    %59 = vector.broadcast %c7_i32 : i32 to vector<1x128xi32>
    %60 = arith.cmpi eq, %0, %59 : vector<1x128xi32>
    %61 = vector.shape_cast %60 : vector<1x128xi1> to vector<1x128xi1>
    %62 = vector.broadcast %61 : vector<1x128xi1> to vector<8x128xi1>
    %63 = vector.shape_cast %58 : vector<8x1xf32> to vector<8x1xf32>
    %64 = vector.broadcast %63 : vector<8x1xf32> to vector<8x128xf32>
    %65 = arith.select %62, %64, %57 : vector<8x128xi1>, vector<8x128xf32>
    %c0_10 = arith.constant 0 : index
    %c0_11 = arith.constant 0 : index
    %66 = vector.load %arg3[%c0_10, %c0_11] : memref<8x128xf32, #tpu.memory_space<vmem>>, vector<8x128xf32>
    tpu.vector_store %arg3[%c0_10, %c0_11], %65 {strides = array<i32>} : memref<8x128xf32, #tpu.memory_space<vmem>>, vector<8x128xf32>,
    return
  }
  func.func @transform_0(%arg0: i32) -> (i32, i32) {
    %c0_i32 = arith.constant 0 : i32
    %c0_i32_0 = arith.constant 0 : i32
    return %c0_i32, %arg0 : i32, i32
  }
  func.func @transform_1(%arg0: i32) -> (i32, i32) {
    %c0_i32 = arith.constant 0 : i32
    %c0_i32_0 = arith.constant 0 : i32
    %c0_i32_1 = arith.constant 0 : i32
    return %c0_i32, %c0_i32_0 : i32, i32
  }
  func.func @transform_2(%arg0: i32) -> (i32, i32) {
    %c0_i32 = arith.constant 0 : i32
    %c0_i32_0 = arith.constant 0 : i32
    return %c0_i32, %arg0 : i32, i32
  }
}

</mosaic_0001>

<llo_original>
// kernel: tpu_custom_call.1
$region0: #{tpu_custom_call.1}
  #allocation0 [shape = 'u32[]', space=smem, size = 0x4, offset = 0x4, fixed_abs, tag = 'smem constant byte address 0x4 - core index']
  #allocation1 [shape = 'u32[72,128]{1,0:T(1,128)}', space=vmem, size = 0x9000, scoped, tag = 'internal scratch']
  %s0 = inlined_call_operand.hbm [shape: s32[1,22], index: 0, kind: input, shape index: {}]
  %s1 = inlined_call_operand.hbm [shape: f32[8,128], index: 1, kind: input, shape index: {}]
  %s2 = inlined_call_operand.hbm [shape: f32[8,22], index: 2, kind: output, shape index: {}]
  %s3 = sld [smem:[#allocation0]]
  $region26: #{tpu_custom_call.1} parent=0
    _
  %s5 = ssub.s32 1, %s3
  %s6 = scalar_select 0, %s5, %s3
  $region1: #{tpu_custom_call.1} parent=0
    #allocation2 [shape = 'u8[512]{0}', space=vmem, size = 0x400, scoped, tag = 'input window, operand 0, single buffered']
    #allocation3 [shape = 's32[1]{0}', space=sflag, size = 0x4, scoped, tag = 'scoped memory for tpu_custom_call.1']
    #allocation4 [shape = 's32[1]{0}', space=sflag, size = 0x4, scoped, tag = 'scoped memory for tpu_custom_call.1']
    #allocation5 [shape = 'u8[4096]{0}', space=vmem, size = 0x1000, scoped, tag = 'input window, operand 1, single buffered']
    #allocation6 [shape = 's32[1]{0}', space=sflag, size = 0x4, scoped, tag = 'scoped memory for tpu_custom_call.1']
    #allocation7 [shape = 'u8[4096]{0}', space=vmem, size = 0x1000, scoped, tag = 'output window, operand 0, single buffered']
    %7 = vsyncpa [#allocation3], 0
    %8 = vsyncpa [#allocation6], 0
    %9 = vsyncpa [#allocation4], 0
    // Predicated region
    $region2: #{tpu_custom_call.1} parent=1 // pred_check
      _
    $region3: #{tpu_custom_call.1} parent=1 // pred_check_branch
      %11 = sbr.rel (0) target = $region5
    $region4: #{tpu_custom_call.1} parent=1 // pred_region
      %13 = vsyncadd [#allocation3], 0
      %s15 = sshll.u32 %s0, 4
      %s16 = int_to_ptr.hbm [resolvable:$true] %s15
      %s17 = sshll.u32 [#allocation2], 4
      %s18 = int_to_ptr.vmem [resolvable:$true] %s17
      %20 = dma.hbm_to_vmem [thread:$0]  %s16, 16, %s18, [#allocation3]
    $region5: #{tpu_custom_call.1} parent=1 // pred_fallthru
      _
    // Predicated region
    $region6: #{tpu_custom_call.1} parent=1 // pred_check
      _
    $region7: #{tpu_custom_call.1} parent=1 // pred_check_branch
      %22 = sbr.rel (0) target = $region9
    $region8: #{tpu_custom_call.1} parent=1 // pred_region
      %24 = vsyncadd [#allocation6], 0
      %s26 = sshll.u32 %s1, 4
      %s27 = int_to_ptr.hbm [resolvable:$true] %s26
      %s28 = sshll.u32 [#allocation5], 4
      %s29 = int_to_ptr.vmem [resolvable:$true] %s28
      %31 = dma.hbm_to_vmem [thread:$0]  %s27, 128, %s29, [#allocation6]
    $region9: #{tpu_custom_call.1} parent=1 // pred_fallthru
      _
    // Predicated region
    $region10: #{tpu_custom_call.1} parent=1 // pred_check
      _
    $region11: #{tpu_custom_call.1} parent=1 // pred_check_branch
      %33 = sbr.rel (0) target = $region13
    $region12: #{tpu_custom_call.1} parent=1 // pred_region
      %35 = dma.done [#allocation3], 16
    $region13: #{tpu_custom_call.1} parent=1 // pred_fallthru
      _
    // Predicated region
    $region14: #{tpu_custom_call.1} parent=1 // pred_check
      _
    $region15: #{tpu_custom_call.1} parent=1 // pred_check_branch
      %37 = sbr.rel (0) target = $region17
    $region16: #{tpu_custom_call.1} parent=1 // pred_region
      %39 = dma.done [#allocation6], 128
    $region17: #{tpu_custom_call.1} parent=1 // pred_fallthru
      _
    %v40 = vld [vmem:[#allocation2] sm:$0x1]
    %v41 = vld [vmem:[#allocation5] sm:$0xff]
    %vm42 = vcmp.eq.s32.totalorder %v40, 0
    %v43 = vsel %vm42, 1, 0
    %v44 = vperm.slane %v43, 0
    %vm45 = vcmp.eq.s32.totalorder %v44, 1
    %47 = vset.pattern.permute.xlu0 0
    %48 = vperm.xlu0 %47, %v41
    %v49 = vpop.permute.xlu0 %48
    %v51 = vsel %vm45, %v49, 0.0
    %vm52 = vcmp.eq.s32.totalorder %v40, 1
    %v53 = vsel %vm52, 1, 0
    %v54 = vperm.slane %v53, 0
    %vm55 = vcmp.eq.s32.totalorder %v54, 1
    %56 = vset.pattern.permute.xlu0 1
    %57 = vperm.xlu0 %56, %v41
    %v58 = vpop.permute.xlu0 %57
    %v60 = vsel %vm55, %v58, %v51
    %vm61 = vcmp.eq.s32.totalorder %v40, 2
    %v62 = vsel %vm61, 1, 0
    %v63 = vperm.slane %v62, 0
    %vm64 = vcmp.eq.s32.totalorder %v63, 1
    %65 = vset.pattern.permute.xlu0 2
    %66 = vperm.xlu0 %65, %v41
    %v67 = vpop.permute.xlu0 %66
    %v69 = vsel %vm64, %v67, %v60
    %vm70 = vcmp.eq.s32.totalorder %v40, 3
    %v71 = vsel %vm70, 1, 0
    %v72 = vperm.slane %v71, 0
    %vm73 = vcmp.eq.s32.totalorder %v72, 1
    %74 = vset.pattern.permute.xlu0 3
    %75 = vperm.xlu0 %74, %v41
    %v76 = vpop.permute.xlu0 %75
    %v78 = vsel %vm73, %v76, %v69
    %vm79 = vcmp.eq.s32.totalorder %v40, 4
    %v80 = vsel %vm79, 1, 0
    %v81 = vperm.slane %v80, 0
    %vm82 = vcmp.eq.s32.totalorder %v81, 1
    %83 = vset.pattern.permute.xlu0 4
    %84 = vperm.xlu0 %83, %v41
    %v85 = vpop.permute.xlu0 %84
    %v87 = vsel %vm82, %v85, %v78
    %vm88 = vcmp.eq.s32.totalorder %v40, 5
    %v89 = vsel %vm88, 1, 0
    %v90 = vperm.slane %v89, 0
    %vm91 = vcmp.eq.s32.totalorder %v90, 1
    %92 = vset.pattern.permute.xlu0 5
    %93 = vperm.xlu0 %92, %v41
    %v94 = vpop.permute.xlu0 %93
    %v96 = vsel %vm91, %v94, %v87
    %vm97 = vcmp.eq.s32.totalorder %v40, 6
    %v98 = vsel %vm97, 1, 0
    %v99 = vperm.slane %v98, 0
    %vm100 = vcmp.eq.s32.totalorder %v99, 1
    %101 = vset.pattern.permute.xlu0 6
    %102 = vperm.xlu0 %101, %v41
    %v103 = vpop.permute.xlu0 %102
    %v105 = vsel %vm100, %v103, %v96
    %vm106 = vcmp.eq.s32.totalorder %v40, 7
    %v107 = vsel %vm106, 1, 0
    %v108 = vperm.slane %v107, 0
    %vm109 = vcmp.eq.s32.totalorder %v108, 1
    %110 = vset.pattern.permute.xlu0 7
    %111 = vperm.xlu0 %110, %v41
    %v112 = vpop.permute.xlu0 %111
    %v114 = vsel %vm109, %v112, %v105
    %115 = vst [vmem:[#allocation7] sm:$0xff] %v114
    // Predicated region
    $region18: #{tpu_custom_call.1} parent=1 // pred_check
      _
    $region19: #{tpu_custom_call.1} parent=1 // pred_check_branch
      %117 = sbr.rel (0) target = $region21
    $region20: #{tpu_custom_call.1} parent=1 // pred_region
      %119 = vsyncadd [#allocation4], 0
      %s121 = sshll.u32 [#allocation7], 4
      %s122 = int_to_ptr.vmem [resolvable:$true] %s121
      %s123 = sshll.u32 %s2, 4
      %s124 = int_to_ptr.hbm [resolvable:$true] %s123
      %126 = dma.vmem_to_hbm [thread:$0]  %s122, 128, %s124, [#allocation4]
    $region21: #{tpu_custom_call.1} parent=1 // pred_fallthru
      _
    // Predicated region
    $region22: #{tpu_custom_call.1} parent=1 // pred_check
      _
    $region23: #{tpu_custom_call.1} parent=1 // pred_check_branch
      %128 = sbr.rel (0) target = $region25
    $region24: #{tpu_custom_call.1} parent=1 // pred_region
      %130 = dma.done [#allocation4], 128
    $region25: #{tpu_custom_call.1} parent=1 // pred_fallthru
      _
    %131 = vsyncpa [#allocation3], 1
    %132 = vsyncpa [#allocation6], 1
    %133 = vsyncpa [#allocation4], 1

</llo_original>
